<compile_context>
chip_gen: v5e
topology: v5e:2x2
jax: 0.10.0
libtpu: 0.0.40
codegen_flags: <defaults>
</compile_context>

<pallas_src>
import math
from functools import partial

import jax
import jax.numpy as jnp
from jax import lax
from jax.experimental import pallas as pl
from jax.experimental.pallas import tpu as pltpu


# ---------------------------------------------------------------------------
# Kernels
# ---------------------------------------------------------------------------
def _qkv_proj_kernel(xq_ref, xk_ref, xv_ref, wq_ref, wk_ref, wv_ref,
                     bq_ref, bk_ref, bv_ref, qo_ref, ko_ref, vo_ref):
    """Three projections per grid step: x @ W + b, bf16 in / f32 acc / bf16 out."""
    def proj(x_ref, w_ref, b_ref, o_ref):
        x = x_ref[...].astype(jnp.bfloat16)
        acc = jnp.dot(x, w_ref[...], preferred_element_type=jnp.float32)
        o_ref[...] = (acc + b_ref[...]).astype(o_ref.dtype)

    proj(xq_ref, wq_ref, bq_ref, qo_ref)
    proj(xk_ref, wk_ref, bk_ref, ko_ref)
    proj(xv_ref, wv_ref, bv_ref, vo_ref)


def _linear_kernel(x_ref, w_ref, b_ref, o_ref):
    """Output projection: bf16 x @ bf16 W + f32 b -> f32 out."""
    acc = jnp.dot(x_ref[...], w_ref[...], preferred_element_type=jnp.float32)
    o_ref[...] = (acc + b_ref[...]).astype(o_ref.dtype)


def _flash_attn_kernel(q_ref, k_ref, v_ref, o_ref, m_ref, l_ref, acc_ref,
                       *, num_heads, d_k, tkv, seq_len, need_kv_mask):
    """Flash-style online softmax over KV tiles, all heads of one batch elem.

    Blocks: q/o (1, tq, d_model) bf16, k/v (1, tkv, d_model) bf16.
    Scratch: m/l (num_heads, tq, 1) f32, acc (tq, d_model) f32.
    The 1/sqrt(d_k) scale is already folded into q (via W_q in the wrapper).
    """
    ki = pl.program_id(2)

    @pl.when(ki == 0)
    def _():
        m_ref[...] = jnp.full_like(m_ref, -jnp.inf)
        l_ref[...] = jnp.zeros_like(l_ref)
        acc_ref[...] = jnp.zeros_like(acc_ref)

    # Hoisted block loads (already bf16; no per-head casts / scaling).
    q = q_ref[0]   # (tq, d_model)
    k = k_ref[0]   # (tkv, d_model)
    v = v_ref[0]   # (tkv, d_model)

    if need_kv_mask:
        kv_index = ki * tkv + lax.broadcasted_iota(jnp.int32, (1, tkv), 1)
        kv_valid = kv_index < seq_len                      # (1, tkv)

    # Contract the d_k axes of both operands (q @ k.T without an XLU transpose).
    dn = (((1,), (1,)), ((), ()))

    for h in range(num_heads):                             # static unroll, H small
        lo, hi = h * d_k, (h + 1) * d_k
        qh = q[:, lo:hi]
        kh = k[:, lo:hi]
        vh = v[:, lo:hi]

        s = lax.dot_general(qh, kh, dn,
                            preferred_element_type=jnp.float32)   # (tq, tkv) f32
        if need_kv_mask:
            s = jnp.where(kv_valid, s, -1e30)

        m_prev = m_ref[h]                                  # (tq, 1)
        l_prev = l_ref[h]
        m_new = jnp.maximum(m_prev, jnp.max(s, axis=-1, keepdims=True))
        alpha = jnp.exp(m_prev - m_new)
        p = jnp.exp(s - m_new)                             # (tq, tkv) f32

        l_ref[h] = alpha * l_prev + jnp.sum(p, axis=-1, keepdims=True)
        m_ref[h] = m_new

        # Per-head direct accumulation into the shared (tq, d_model) scratch.
        acc_ref[:, lo:hi] = alpha * acc_ref[:, lo:hi] + jnp.dot(
            p.astype(v.dtype), vh, preferred_element_type=jnp.float32)

    @pl.when(ki == pl.num_programs(2) - 1)
    def _():
        for h in range(num_heads):
            lo, hi = h * d_k, (h + 1) * d_k
            inv_l = pl.reciprocal(l_ref[h], approx=True)   # EUP
            acc_ref[:, lo:hi] = acc_ref[:, lo:hi] * inv_l
        # Single full-width lane-dense store of the merged-head context.
        o_ref[0] = acc_ref[...].astype(o_ref.dtype)


# ---------------------------------------------------------------------------
# Wrappers
# ---------------------------------------------------------------------------
_VMEM_LIMIT = 64 * 1024 * 1024


def fused_qkv_projection(xq, xk, xv, wq, wk, wv, bq, bk, bv):
    """Three (M, d_in) @ (d_in, d_out) + b GEMMs in a single pallas_call."""
    M, d_in = xq.shape
    d_out = wq.shape[1]
    tm = M if M <= 256 else 256
    tn = d_out if d_out <= 512 else 512
    grid = (pl.cdiv(M, tm), pl.cdiv(d_out, tn))

    x_spec = pl.BlockSpec((tm, d_in), lambda i, j: (i, 0))
    w_spec = pl.BlockSpec((d_in, tn), lambda i, j: (0, j))
    b_spec = pl.BlockSpec((1, tn), lambda i, j: (0, j))
    o_spec = pl.BlockSpec((tm, tn), lambda i, j: (i, j))
    out_sd = jax.ShapeDtypeStruct((M, d_out), jnp.bfloat16)

    cost = pl.CostEstimate(
        flops=3 * 2 * M * d_in * d_out,
        transcendentals=0,
        bytes_accessed=3 * (M * d_in * 4 + d_in * d_out * 2 + M * d_out * 2),
    )
    return pl.pallas_call(
        _qkv_proj_kernel,
        out_shape=(out_sd, out_sd, out_sd),
        grid=grid,
        in_specs=[x_spec, x_spec, x_spec,
                  w_spec, w_spec, w_spec,
                  b_spec, b_spec, b_spec],
        out_specs=(o_spec, o_spec, o_spec),
        compiler_params=pltpu.CompilerParams(
            dimension_semantics=("parallel", "parallel"),
            vmem_limit_bytes=_VMEM_LIMIT),
        cost_estimate=cost,
    )(xq, xk, xv, wq, wk, wv, bq, bk, bv)


def pallas_linear(x, w, b):
    """x: (M, d_in) bf16, w: (d_in, d_out) bf16, b: (1, d_out) f32 -> (M, d_out) f32."""
    M, d_in = x.shape
    d_out = w.shape[1]
    tm = M if M <= 512 else 512
    tn = d_out if d_out <= 512 else 512
    grid = (pl.cdiv(M, tm), pl.cdiv(d_out, tn))

    cost = pl.CostEstimate(
        flops=2 * M * d_in * d_out,
        transcendentals=0,
        bytes_accessed=M * d_in * 2 + d_in * d_out * 2 + M * d_out * 4,
    )
    return pl.pallas_call(
        _linear_kernel,
        out_shape=jax.ShapeDtypeStruct((M, d_out), jnp.float32),
        grid=grid,
        in_specs=[
            pl.BlockSpec((tm, d_in), lambda i, j: (i, 0)),
            pl.BlockSpec((d_in, tn), lambda i, j: (0, j)),
            pl.BlockSpec((1, tn), lambda i, j: (0, j)),
        ],
        out_specs=pl.BlockSpec((tm, tn), lambda i, j: (i, j)),
        compiler_params=pltpu.CompilerParams(
            dimension_semantics=("parallel", "parallel"),
            vmem_limit_bytes=_VMEM_LIMIT),
        cost_estimate=cost,
    )(x, w, b)


def flash_attention(q, k, v, num_heads):
    """q, k, v: (B, S, d_model) bf16, head-interleaved -> context (B, S, d_model) bf16."""
    B, S, d_model = q.shape
    d_k = d_model // num_heads
    tq = S if S <= 256 else 256        # query tile
    tkv = S if S <= 512 else 512       # KV tile (>=256 wide for v6e MXU once S grows)
    grid = (B, pl.cdiv(S, tq), pl.cdiv(S, tkv))

    q_spec = pl.BlockSpec((1, tq, d_model), lambda b, qi, ki: (b, qi, 0))
    kv_spec = pl.BlockSpec((1, tkv, d_model), lambda b, qi, ki: (b, ki, 0))

    kernel = partial(_flash_attn_kernel, num_heads=num_heads, d_k=d_k,
                     tkv=tkv, seq_len=S, need_kv_mask=(S % tkv != 0))

    cost = pl.CostEstimate(
        flops=4 * B * S * S * d_model,             # QK^T + PV across all heads
        transcendentals=B * num_heads * S * S,     # exp
        bytes_accessed=4 * B * S * d_model * 2,
    )
    return pl.pallas_call(
        kernel,
        out_shape=jax.ShapeDtypeStruct((B, S, d_model), jnp.bfloat16),
        grid=grid,
        in_specs=[q_spec, kv_spec, kv_spec],
        out_specs=q_spec,
        scratch_shapes=[
            pltpu.VMEM((num_heads, tq, 1), jnp.float32),   # running max
            pltpu.VMEM((num_heads, tq, 1), jnp.float32),   # running denom
            pltpu.VMEM((tq, d_model), jnp.float32),        # context accumulator
        ],
        compiler_params=pltpu.CompilerParams(
            dimension_semantics=("parallel", "parallel", "arbitrary"),
            vmem_limit_bytes=_VMEM_LIMIT),
        cost_estimate=cost,
    )(q, k, v)


def multi_head_attention(Q, K, V, params, num_heads):
    """Forward pass equivalent to the PyTorch MultiHeadAttention module."""
    B, S, d_model = Q.shape
    d_k = d_model // num_heads
    M = B * S
    scale = 1.0 / math.sqrt(d_k)

    # bf16 weights (halves weight DMA + VMEM); fold the 1/sqrt(d_k) scale into
    # the query projection so the attention kernel needs no scaling at all.
    wq = (params["W_q_w"] * scale).astype(jnp.bfloat16)
    wk = params["W_k_w"].astype(jnp.bfloat16)
    wv = params["W_v_w"].astype(jnp.bfloat16)
    wo = params["W_o_w"].astype(jnp.bfloat16)
    bq = (params["W_q_b"] * scale).reshape(1, d_model)
    bk = params["W_k_b"].reshape(1, d_model)
    bv = params["W_v_b"].reshape(1, d_model)
    bo = params["W_o_b"].reshape(1, d_model)

    # --- fused Q/K/V projections: one pallas_call, three inputs, no stacking ---
    q_p, k_p, v_p = fused_qkv_projection(
        Q.reshape(M, d_model), K.reshape(M, d_model), V.reshape(M, d_model),
        wq, wk, wv, bq, bk, bv)

    q_p = q_p.reshape(B, S, d_model)
    k_p = k_p.reshape(B, S, d_model)
    v_p = v_p.reshape(B, S, d_model)

    # --- flash-style attention: all heads per (batch, q-tile), KV-tiled ---
    ctx = flash_attention(q_p, k_p, v_p, num_heads)        # (B, S, d_model) bf16

    # --- output projection ---
    out = pallas_linear(ctx.reshape(M, d_model), wo, bo)   # (M, d_model) f32
    return out.reshape(B, S, d_model)


# ---------------------------------------------------------------------------
# Pure-JAX reference (sanity check)
# ---------------------------------------------------------------------------
def reference_mha(Q, K, V, params, num_heads):
    B, S, d_model = Q.shape
    d_k = d_model // num_heads

    def lin(x, name):
        return x @ params[f"{name}_w"] + params[f"{name}_b"]

    def split(x):
        return x.reshape(B, S, num_heads, d_k).transpose(0, 2, 1, 3)

    q, k, v = split(lin(Q, "W_q")), split(lin(K, "W_k")), split(lin(V, "W_v"))
    scores = jnp.einsum("bhqd,bhkd->bhqk", q, k) / math.sqrt(d_k)
    attn = jax.nn.softmax(scores, axis=-1)
    ctx = jnp.einsum("bhqk,bhkd->bhqd", attn, v)
    ctx = ctx.transpose(0, 2, 1, 3).reshape(B, S, d_model)
    return ctx @ params["W_o_w"] + params["W_o_b"]


# ---------------------------------------------------------------------------
# Main
# ---------------------------------------------------------------------------
if __name__ == "__main__":
    batch, seq, d_model, num_heads = 2, 8, 32, 4

    key = jax.random.PRNGKey(0)
    keys = jax.random.split(key, 12)

    # deterministic synthetic parameters (nn.Linear(d_model, d_model) x 4)
    wscale = 1.0 / math.sqrt(d_model)
    params = {}
    for i, name in enumerate(["W_q", "W_k", "W_v", "W_o"]):
        params[f"{name}_w"] = (
            jax.random.normal(keys[2 * i], (d_model, d_model), jnp.float32) * wscale
        )
        params[f"{name}_b"] = (
            jax.random.normal(keys[2 * i + 1], (d_model,), jnp.float32) * wscale
        )

    Q = jax.random.normal(keys[8], (batch, seq, d_model), jnp.float32)
    K = jax.random.normal(keys[9], (batch, seq, d_model), jnp.float32)
    V = jax.random.normal(keys[10], (batch, seq, d_model), jnp.float32)

    out = multi_head_attention(Q, K, V, params, num_heads)
    out = jax.block_until_ready(out)

    ref = reference_mha(Q, K, V, params, num_heads)
    assert out.shape == (batch, seq, d_model)
    # bf16 intermediates + approx reciprocal -> compare against f32 ref loosely
    assert jnp.allclose(out, ref, atol=1e-1, rtol=1e-1), float(
        jnp.max(jnp.abs(out - ref))
    )

    print("KERNEL_OK")
</pallas_src>

<mosaic_0001>
module attributes {stable_mosaic.version = 11 : i64} {
  func.func @_qkv_proj_kernel(%arg0: i32, %arg1: i32, %arg2: memref<16x32xf32, #tpu.memory_space<vmem>>, %arg3: memref<16x32xf32, #tpu.memory_space<vmem>>, %arg4: memref<16x32xf32, #tpu.memory_space<vmem>>, %arg5: memref<32x32xbf16, #tpu.memory_space<vmem>>, %arg6: memref<32x32xbf16, #tpu.memory_space<vmem>>, %arg7: memref<32x32xbf16, #tpu.memory_space<vmem>>, %arg8: memref<1x32xf32, #tpu.memory_space<vmem>>, %arg9: memref<1x32xf32, #tpu.memory_space<vmem>>, %arg10: memref<1x32xf32, #tpu.memory_space<vmem>>, %arg11: memref<16x32xbf16, #tpu.memory_space<vmem>>, %arg12: memref<16x32xbf16, #tpu.memory_space<vmem>>, %arg13: memref<16x32xbf16, #tpu.memory_space<vmem>>) attributes {dimension_semantics = [#tpu.dimension_semantics<parallel>, #tpu.dimension_semantics<parallel>], iteration_bounds = array<i64: 1, 1>, scalar_prefetch = 0 : i64, scratch_operands = 0 : i64, tpu.core_type = #tpu.core_type<tc>, window_params = [{transform_indices = @transform_0, window_bounds = array<i64: 16, 32>}, {transform_indices = @transform_1, window_bounds = array<i64: 16, 32>}, {transform_indices = @transform_2, window_bounds = array<i64: 16, 32>}, {transform_indices = @transform_3, window_bounds = array<i64: 32, 32>}, {transform_indices = @transform_4, window_bounds = array<i64: 32, 32>}, {transform_indices = @transform_5, window_bounds = array<i64: 32, 32>}, {transform_indices = @transform_6, window_bounds = array<i64: 1, 32>}, {transform_indices = @transform_7, window_bounds = array<i64: 1, 32>}, {transform_indices = @transform_8, window_bounds = array<i64: 1, 32>}, {transform_indices = @transform_9, window_bounds = array<i64: 16, 32>}, {transform_indices = @transform_10, window_bounds = array<i64: 16, 32>}, {transform_indices = @transform_11, window_bounds = array<i64: 16, 32>}]} {
    %c0 = arith.constant 0 : index
    %c0_0 = arith.constant 0 : index
    %0 = vector.load %arg2[%c0, %c0_0] : memref<16x32xf32, #tpu.memory_space<vmem>>, vector<16x32xf32>
    %1 = arith.truncf %0 : vector<16x32xf32> to vector<16x32xbf16>
    %c0_1 = arith.constant 0 : index
    %c0_2 = arith.constant 0 : index
    %2 = vector.load %arg5[%c0_1, %c0_2] : memref<32x32xbf16, #tpu.memory_space<vmem>>, vector<32x32xbf16>
    %cst = arith.constant dense<0.000000e+00> : vector<16x32xf32>
    %3 = tpu.matmul %1, %2, %cst {dimension_numbers = #tpu.dot_dimension_numbers<[1], [0], [0], [1], [0, 0, 1, 1], [], []>} : vector<16x32xbf16>, vector<32x32xbf16>, vector<16x32xf32> -> vector<16x32xf32>
    %c0_3 = arith.constant 0 : index
    %c0_4 = arith.constant 0 : index
    %4 = vector.load %arg8[%c0_3, %c0_4] : memref<1x32xf32, #tpu.memory_space<vmem>>, vector<1x32xf32>
    %5 = vector.broadcast %4 : vector<1x32xf32> to vector<16x32xf32>
    %6 = arith.addf %3, %5 : vector<16x32xf32>
    %7 = arith.truncf %6 : vector<16x32xf32> to vector<16x32xbf16>
    %c0_5 = arith.constant 0 : index
    %c0_6 = arith.constant 0 : index
    %8 = vector.load %arg11[%c0_5, %c0_6] : memref<16x32xbf16, #tpu.memory_space<vmem>>, vector<16x32xbf16>
    tpu.vector_store %arg11[%c0_5, %c0_6], %7 {strides = array<i32>} : memref<16x32xbf16, #tpu.memory_space<vmem>>, vector<16x32xbf16>,
    %c0_7 = arith.constant 0 : index
    %c0_8 = arith.constant 0 : index
    %9 = vector.load %arg3[%c0_7, %c0_8] : memref<16x32xf32, #tpu.memory_space<vmem>>, vector<16x32xf32>
    %10 = arith.truncf %9 : vector<16x32xf32> to vector<16x32xbf16>
    %c0_9 = arith.constant 0 : index
    %c0_10 = arith.constant 0 : index
    %11 = vector.load %arg6[%c0_9, %c0_10] : memref<32x32xbf16, #tpu.memory_space<vmem>>, vector<32x32xbf16>
    %cst_11 = arith.constant dense<0.000000e+00> : vector<16x32xf32>
    %12 = tpu.matmul %10, %11, %cst_11 {dimension_numbers = #tpu.dot_dimension_numbers<[1], [0], [0], [1], [0, 0, 1, 1], [], []>} : vector<16x32xbf16>, vector<32x32xbf16>, vector<16x32xf32> -> vector<16x32xf32>
    %c0_12 = arith.constant 0 : index
    %c0_13 = arith.constant 0 : index
    %13 = vector.load %arg9[%c0_12, %c0_13] : memref<1x32xf32, #tpu.memory_space<vmem>>, vector<1x32xf32>
    %14 = vector.broadcast %13 : vector<1x32xf32> to vector<16x32xf32>
    %15 = arith.addf %12, %14 : vector<16x32xf32>
    %16 = arith.truncf %15 : vector<16x32xf32> to vector<16x32xbf16>
    %c0_14 = arith.constant 0 : index
    %c0_15 = arith.constant 0 : index
    %17 = vector.load %arg12[%c0_14, %c0_15] : memref<16x32xbf16, #tpu.memory_space<vmem>>, vector<16x32xbf16>
    tpu.vector_store %arg12[%c0_14, %c0_15], %16 {strides = array<i32>} : memref<16x32xbf16, #tpu.memory_space<vmem>>, vector<16x32xbf16>,
    %c0_16 = arith.constant 0 : index
    %c0_17 = arith.constant 0 : index
    %18 = vector.load %arg4[%c0_16, %c0_17] : memref<16x32xf32, #tpu.memory_space<vmem>>, vector<16x32xf32>
    %19 = arith.truncf %18 : vector<16x32xf32> to vector<16x32xbf16>
    %c0_18 = arith.constant 0 : index
    %c0_19 = arith.constant 0 : index
    %20 = vector.load %arg7[%c0_18, %c0_19] : memref<32x32xbf16, #tpu.memory_space<vmem>>, vector<32x32xbf16>
    %cst_20 = arith.constant dense<0.000000e+00> : vector<16x32xf32>
    %21 = tpu.matmul %19, %20, %cst_20 {dimension_numbers = #tpu.dot_dimension_numbers<[1], [0], [0], [1], [0, 0, 1, 1], [], []>} : vector<16x32xbf16>, vector<32x32xbf16>, vector<16x32xf32> -> vector<16x32xf32>
    %c0_21 = arith.constant 0 : index
    %c0_22 = arith.constant 0 : index
    %22 = vector.load %arg10[%c0_21, %c0_22] : memref<1x32xf32, #tpu.memory_space<vmem>>, vector<1x32xf32>
    %23 = vector.broadcast %22 : vector<1x32xf32> to vector<16x32xf32>
    %24 = arith.addf %21, %23 : vector<16x32xf32>
    %25 = arith.truncf %24 : vector<16x32xf32> to vector<16x32xbf16>
    %c0_23 = arith.constant 0 : index
    %c0_24 = arith.constant 0 : index
    %26 = vector.load %arg13[%c0_23, %c0_24] : memref<16x32xbf16, #tpu.memory_space<vmem>>, vector<16x32xbf16>
    tpu.vector_store %arg13[%c0_23, %c0_24], %25 {strides = array<i32>} : memref<16x32xbf16, #tpu.memory_space<vmem>>, vector<16x32xbf16>,
    return
  }
  func.func @transform_0(%arg0: i32, %arg1: i32) -> (i32, i32) {
    %c0_i32 = arith.constant 0 : i32
    %c0_i32_0 = arith.constant 0 : i32
    return %arg0, %c0_i32 : i32, i32
  }
  func.func @transform_1(%arg0: i32, %arg1: i32) -> (i32, i32) {
    %c0_i32 = arith.constant 0 : i32
    %c0_i32_0 = arith.constant 0 : i32
    return %arg0, %c0_i32 : i32, i32
  }
  func.func @transform_2(%arg0: i32, %arg1: i32) -> (i32, i32) {
    %c0_i32 = arith.constant 0 : i32
    %c0_i32_0 = arith.constant 0 : i32
    return %arg0, %c0_i32 : i32, i32
  }
  func.func @transform_3(%arg0: i32, %arg1: i32) -> (i32, i32) {
    %c0_i32 = arith.constant 0 : i32
    %c0_i32_0 = arith.constant 0 : i32
    return %c0_i32, %arg1 : i32, i32
  }
  func.func @transform_4(%arg0: i32, %arg1: i32) -> (i32, i32) {
    %c0_i32 = arith.constant 0 : i32
    %c0_i32_0 = arith.constant 0 : i32
    return %c0_i32, %arg1 : i32, i32
  }
  func.func @transform_5(%arg0: i32, %arg1: i32) -> (i32, i32) {
    %c0_i32 = arith.constant 0 : i32
    %c0_i32_0 = arith.constant 0 : i32
    return %c0_i32, %arg1 : i32, i32
  }
  func.func @transform_6(%arg0: i32, %arg1: i32) -> (i32, i32) {
    %c0_i32 = arith.constant 0 : i32
    %c0_i32_0 = arith.constant 0 : i32
    return %c0_i32, %arg1 : i32, i32
  }
  func.func @transform_7(%arg0: i32, %arg1: i32) -> (i32, i32) {
    %c0_i32 = arith.constant 0 : i32
    %c0_i32_0 = arith.constant 0 : i32
    return %c0_i32, %arg1 : i32, i32
  }
  func.func @transform_8(%arg0: i32, %arg1: i32) -> (i32, i32) {
    %c0_i32 = arith.constant 0 : i32
    %c0_i32_0 = arith.constant 0 : i32
    return %c0_i32, %arg1 : i32, i32
  }
  func.func @transform_9(%arg0: i32, %arg1: i32) -> (i32, i32) {
    %c0_i32 = arith.constant 0 : i32
    return %arg0, %arg1 : i32, i32
  }
  func.func @transform_10(%arg0: i32, %arg1: i32) -> (i32, i32) {
    %c0_i32 = arith.constant 0 : i32
    return %arg0, %arg1 : i32, i32
  }
  func.func @transform_11(%arg0: i32, %arg1: i32) -> (i32, i32) {
    %c0_i32 = arith.constant 0 : i32
    return %arg0, %arg1 : i32, i32
  }
}

</mosaic_0001>

<llo_original>
// kernel: tpu_custom_call.1
$region0: #{tpu_custom_call.1}
  #allocation0 [shape = 'u32[]', space=smem, size = 0x4, offset = 0x4, fixed_abs, tag = 'smem constant byte address 0x4 - core index']
  #allocation1 [shape = 'u32[72,128]{1,0:T(1,128)}', space=vmem, size = 0x9000, scoped, tag = 'internal scratch']
  %s0 = inlined_call_operand.hbm [shape: f32[16,32], index: 0, kind: input, shape index: {}]
  %s1 = inlined_call_operand.hbm [shape: f32[16,32], index: 1, kind: input, shape index: {}]
  %s2 = inlined_call_operand.hbm [shape: f32[16,32], index: 2, kind: input, shape index: {}]
  %s3 = inlined_call_operand.hbm [shape: bf16[32,32], index: 3, kind: input, shape index: {}]
  %s4 = inlined_call_operand.hbm [shape: bf16[32,32], index: 4, kind: input, shape index: {}]
  %s5 = inlined_call_operand.hbm [shape: bf16[32,32], index: 5, kind: input, shape index: {}]
  %s6 = inlined_call_operand.vmem [shape: f32[1,32], index: 6, kind: input, shape index: {}]
  %s7 = inlined_call_operand.vmem [shape: f32[1,32], index: 7, kind: input, shape index: {}]
  %s8 = inlined_call_operand.vmem [shape: f32[1,32], index: 8, kind: input, shape index: {}]
  %s9 = inlined_call_operand.hbm [shape: bf16[16,32], index: 9, kind: output, shape index: {0}]
  %s10 = inlined_call_operand.hbm [shape: bf16[16,32], index: 10, kind: output, shape index: {1}]
  %s11 = inlined_call_operand.hbm [shape: bf16[16,32], index: 11, kind: output, shape index: {2}]
  %12 = xla_tuple %s9, %s10, %s11
  %s13 = sld [smem:[#allocation0]]
  $region86: #{tpu_custom_call.1} parent=0
    _
  %s15 = ssub.s32 1, %s13
  %s16 = scalar_select 0, %s15, %s13
  $region1: #{tpu_custom_call.1} parent=0
    #allocation2 [shape = 'u8[8192]{0}', space=vmem, size = 0x2000, scoped, tag = 'input window, operand 0, single buffered']
    #allocation3 [shape = 's32[1]{0}', space=sflag, size = 0x4, scoped, tag = 'scoped memory for tpu_custom_call.1']
    #allocation4 [shape = 's32[1]{0}', space=sflag, size = 0x4, scoped, tag = 'scoped memory for tpu_custom_call.1']
    #allocation5 [shape = 'u8[8192]{0}', space=vmem, size = 0x2000, scoped, tag = 'input window, operand 1, single buffered']
    #allocation6 [shape = 's32[1]{0}', space=sflag, size = 0x4, scoped, tag = 'scoped memory for tpu_custom_call.1']
    #allocation7 [shape = 'u8[8192]{0}', space=vmem, size = 0x2000, scoped, tag = 'input window, operand 2, single buffered']
    #allocation8 [shape = 'u8[8192]{0}', space=vmem, size = 0x2000, scoped, tag = 'input window, operand 3, single buffered']
    #allocation9 [shape = 's32[1]{0}', space=sflag, size = 0x4, scoped, tag = 'scoped memory for tpu_custom_call.1']
    #allocation10 [shape = 'u8[8192]{0}', space=vmem, size = 0x2000, scoped, tag = 'input window, operand 4, single buffered']
    #allocation11 [shape = 'u8[8192]{0}', space=vmem, size = 0x2000, scoped, tag = 'input window, operand 5, single buffered']
    #allocation12 [shape = 's32[1]{0}', space=sflag, size = 0x4, scoped, tag = 'scoped memory for tpu_custom_call.1']
    #allocation13 [shape = 'u8[4096]{0}', space=vmem, size = 0x1000, scoped, tag = 'output window, operand 0, single buffered']
    #allocation14 [shape = 'u8[4096]{0}', space=vmem, size = 0x1000, scoped, tag = 'output window, operand 1, single buffered']
    #allocation15 [shape = 's32[1]{0}', space=sflag, size = 0x4, scoped, tag = 'scoped memory for tpu_custom_call.1']
    #allocation16 [shape = 'u8[4096]{0}', space=vmem, size = 0x1000, scoped, tag = 'output window, operand 2, single buffered']
    %17 = vsyncpa [#allocation3], 0
    %18 = vsyncpa [#allocation6], 0
    %19 = vsyncpa [#allocation9], 0
    %20 = vsyncpa [#allocation12], 0
    %21 = vsyncpa [#allocation4], 0
    %22 = vsyncpa [#allocation15], 0
    // Predicated region
    $region2: #{tpu_custom_call.1} parent=1 // pred_check
      _
    $region3: #{tpu_custom_call.1} parent=1 // pred_check_branch
      %24 = sbr.rel (0) target = $region5
    $region4: #{tpu_custom_call.1} parent=1 // pred_region
      %26 = vsyncadd [#allocation3], 0
      %s27 = sshll.u32 %s0, 4
      %s28 = int_to_ptr.hbm [resolvable:$true] %s27
      %s29 = sshll.u32 [#allocation2], 4
      %s30 = int_to_ptr.vmem [resolvable:$true] %s29
      %35 = dma.hbm_to_vmem [thread:$0]  %s28, 256, %s30, [#allocation3], 128, 128, 8
    $region5: #{tpu_custom_call.1} parent=1 // pred_fallthru
      _
    // Predicated region
    $region6: #{tpu_custom_call.1} parent=1 // pred_check
      _
    $region7: #{tpu_custom_call.1} parent=1 // pred_check_branch
      %37 = sbr.rel (0) target = $region9
    $region8: #{tpu_custom_call.1} parent=1 // pred_region
      %39 = vsyncadd [#allocation6], 0
      %s40 = sshll.u32 %s1, 4
      %s41 = int_to_ptr.hbm [resolvable:$true] %s40
      %s42 = sshll.u32 [#allocation5], 4
      %s43 = int_to_ptr.vmem [resolvable:$true] %s42
      %48 = dma.hbm_to_vmem [thread:$0]  %s41, 256, %s43, [#allocation6], 128, 128, 8
    $region9: #{tpu_custom_call.1} parent=1 // pred_fallthru
      _
    // Predicated region
    $region10: #{tpu_custom_call.1} parent=1 // pred_check
      _
    $region11: #{tpu_custom_call.1} parent=1 // pred_check_branch
      %50 = sbr.rel (0) target = $region13
    $region12: #{tpu_custom_call.1} parent=1 // pred_region
      %52 = vsyncadd [#allocation6], 0
      %s53 = sshll.u32 %s2, 4
      %s54 = int_to_ptr.hbm [resolvable:$true] %s53
      %s55 = sshll.u32 [#allocation7], 4
      %s56 = int_to_ptr.vmem [resolvable:$true] %s55
      %61 = dma.hbm_to_vmem [thread:$0]  %s54, 256, %s56, [#allocation6], 128, 128, 8
    $region13: #{tpu_custom_call.1} parent=1 // pred_fallthru
      _
    // Predicated region
    $region14: #{tpu_custom_call.1} parent=1 // pred_check
      _
    $region15: #{tpu_custom_call.1} parent=1 // pred_check_branch
      %63 = sbr.rel (0) target = $region17
    $region16: #{tpu_custom_call.1} parent=1 // pred_region
      %65 = vsyncadd [#allocation9], 0
      %s66 = sshll.u32 %s3, 4
      %s67 = int_to_ptr.hbm [resolvable:$true] %s66
      %s68 = sshll.u32 [#allocation8], 4
      %s69 = int_to_ptr.vmem [resolvable:$true] %s68
      %74 = dma.hbm_to_vmem [thread:$0]  %s67, 256, %s69, [#allocation9], 64, 64, 4
    $region17: #{tpu_custom_call.1} parent=1 // pred_fallthru
      _
    // Predicated region
    $region18: #{tpu_custom_call.1} parent=1 // pred_check
      _
    $region19: #{tpu_custom_call.1} parent=1 // pred_check_branch
      %76 = sbr.rel (0) target = $region21
    $region20: #{tpu_custom_call.1} parent=1 // pred_region
      %78 = vsyncadd [#allocation9], 0
      %s79 = sshll.u32 %s4, 4
      %s80 = int_to_ptr.hbm [resolvable:$true] %s79
      %s81 = sshll.u32 [#allocation10], 4
      %s82 = int_to_ptr.vmem [resolvable:$true] %s81
      %87 = dma.hbm_to_vmem [thread:$0]  %s80, 256, %s82, [#allocation9], 64, 64, 4
    $region21: #{tpu_custom_call.1} parent=1 // pred_fallthru
      _
    // Predicated region
    $region22: #{tpu_custom_call.1} parent=1 // pred_check
      _
    $region23: #{tpu_custom_call.1} parent=1 // pred_check_branch
      %89 = sbr.rel (0) target = $region25
    $region24: #{tpu_custom_call.1} parent=1 // pred_region
      %91 = vsyncadd [#allocation12], 0
      %s92 = sshll.u32 %s5, 4
      %s93 = int_to_ptr.hbm [resolvable:$true] %s92
      %s94 = sshll.u32 [#allocation11], 4
      %s95 = int_to_ptr.vmem [resolvable:$true] %s94
      %100 = dma.hbm_to_vmem [thread:$0]  %s93, 256, %s95, [#allocation12], 64, 64, 4
    $region25: #{tpu_custom_call.1} parent=1 // pred_fallthru
      _
    // Predicated region
    $region26: #{tpu_custom_call.1} parent=1 // pred_check
      _
    $region27: #{tpu_custom_call.1} parent=1 // pred_check_branch
      %102 = sbr.rel (0) target = $region29
    $region28: #{tpu_custom_call.1} parent=1 // pred_region
      _
    $region29: #{tpu_custom_call.1} parent=1 // pred_fallthru
      _
    // Predicated region
    $region30: #{tpu_custom_call.1} parent=1 // pred_check
      _
    $region31: #{tpu_custom_call.1} parent=1 // pred_check_branch
      %104 = sbr.rel (0) target = $region33
    $region32: #{tpu_custom_call.1} parent=1 // pred_region
      _
    $region33: #{tpu_custom_call.1} parent=1 // pred_fallthru
      _
    // Predicated region
    $region34: #{tpu_custom_call.1} parent=1 // pred_check
      _
    $region35: #{tpu_custom_call.1} parent=1 // pred_check_branch
      %106 = sbr.rel (0) target = $region37
    $region36: #{tpu_custom_call.1} parent=1 // pred_region
      _
    $region37: #{tpu_custom_call.1} parent=1 // pred_fallthru
      _
    // Predicated region
    $region38: #{tpu_custom_call.1} parent=1 // pred_check
      _
    $region39: #{tpu_custom_call.1} parent=1 // pred_check_branch
      %108 = sbr.rel (0) target = $region41
    $region40: #{tpu_custom_call.1} parent=1 // pred_region
      %110 = dma.done [#allocation3], 256
    $region41: #{tpu_custom_call.1} parent=1 // pred_fallthru
      _
    // Predicated region
    $region42: #{tpu_custom_call.1} parent=1 // pred_check
      _
    $region43: #{tpu_custom_call.1} parent=1 // pred_check_branch
      %112 = sbr.rel (0) target = $region45
    $region44: #{tpu_custom_call.1} parent=1 // pred_region
      %114 = dma.done [#allocation6], 256
    $region45: #{tpu_custom_call.1} parent=1 // pred_fallthru
      _
    // Predicated region
    $region46: #{tpu_custom_call.1} parent=1 // pred_check
      _
    $region47: #{tpu_custom_call.1} parent=1 // pred_check_branch
      %116 = sbr.rel (0) target = $region49
    $region48: #{tpu_custom_call.1} parent=1 // pred_region
      %118 = dma.done [#allocation6], 256
    $region49: #{tpu_custom_call.1} parent=1 // pred_fallthru
      _
    // Predicated region
    $region50: #{tpu_custom_call.1} parent=1 // pred_check
      _
    $region51: #{tpu_custom_call.1} parent=1 // pred_check_branch
      %120 = sbr.rel (0) target = $region53
    $region52: #{tpu_custom_call.1} parent=1 // pred_region
      %122 = dma.done [#allocation9], 256
    $region53: #{tpu_custom_call.1} parent=1 // pred_fallthru
      _
    // Predicated region
    $region54: #{tpu_custom_call.1} parent=1 // pred_check
      _
    $region55: #{tpu_custom_call.1} parent=1 // pred_check_branch
      %124 = sbr.rel (0) target = $region57
    $region56: #{tpu_custom_call.1} parent=1 // pred_region
      %126 = dma.done [#allocation9], 256
    $region57: #{tpu_custom_call.1} parent=1 // pred_fallthru
      _
    // Predicated region
    $region58: #{tpu_custom_call.1} parent=1 // pred_check
      _
    $region59: #{tpu_custom_call.1} parent=1 // pred_check_branch
      %128 = sbr.rel (0) target = $region61
    $region60: #{tpu_custom_call.1} parent=1 // pred_region
      %130 = dma.done [#allocation12], 256
    $region61: #{tpu_custom_call.1} parent=1 // pred_fallthru
      _
    %v132 = vld [vmem:[#allocation2] sm:$0xff]
    %v133 = vld [vmem:[#allocation2 + $0x8] sm:$0xff]
    %v134 = vpack.c.bf16 %v133, %v132
    %v135 = vld [vmem:[#allocation8] sm:$0xf]
    %v136 = vld [vmem:[#allocation8 + $0x4] sm:$0xf]
    %v137 = vld [vmem:[#allocation8 + $0x8] sm:$0xf]
    %v138 = vld [vmem:[#allocation8 + $0xc] sm:$0xf]
    %v139 = vld [vmem:[%s6] sm:$0x1]
    %v141 = vperm.slane %v139, 0
    %v147 = vunpack.c.l.b16 %v135
    %v148 = vunpack.c.l.b16 %v136
    %v149 = vunpack.c.l.b16 %v137
    %v150 = vunpack.c.l.b16 %v138
    %v151 = vpack.c.b16 %v148, %v147
    %v152 = vpack.c.b16 %v150, %v149
    %vm155 = vcmask 261120
    %v157 = vsel %vm155, %v134, 0
    %159 = vmatpush.bf16.msra.mxu0 0
    %160 = vmatpush.bf16.msra.mxu0 0
    %161 = vmatpush.bf16.msra.mxu0 0
    %162 = vmatpush.bf16.msra.mxu0 0
    %163 = vmatpush.bf16.msra.mxu0 0
    %164 = vmatpush.bf16.msra.mxu0 0
    %165 = vmatpush.bf16.msra.mxu0 %v152
    %166 = vmatpush.bf16.msra.mxu0 %v151
    %167 = vmatmul.bf16.gmra.mxu0 %v157
    %v168 = vpop.f32.mrf.mxu0
    %v169 = vadd.f32 %v141, %v168
    %v170 = vpop.f32.mrf.mxu0
    %v171 = vadd.f32 %v141, %v170
    %172 = vdwg.mxu0
    %v173 = vpack.c.bf16 %v169, %v169
    %v174 = vpack.c.bf16 %v171, %v171
    %vm175 = vcmask 257024
    %176 = vst.msk [vmem:[#allocation13] sm:$0xf] %vm175, %v173
    %177 = vst.msk [vmem:[#allocation13 + $0x4] sm:$0xf] %vm175, %v174
    %v178 = vld [vmem:[#allocation5] sm:$0xff]
    %v179 = vld [vmem:[#allocation5 + $0x8] sm:$0xff]
    %v180 = vpack.c.bf16 %v179, %v178
    %v181 = vld [vmem:[#allocation10] sm:$0xf]
    %v182 = vld [vmem:[#allocation10 + $0x4] sm:$0xf]
    %v183 = vld [vmem:[#allocation10 + $0x8] sm:$0xf]
    %v184 = vld [vmem:[#allocation10 + $0xc] sm:$0xf]
    %v185 = vld [vmem:[%s7] sm:$0x1]
    %v187 = vperm.slane %v185, 0
    %v193 = vunpack.c.l.b16 %v181
    %v194 = vunpack.c.l.b16 %v182
    %v195 = vunpack.c.l.b16 %v183
    %v196 = vunpack.c.l.b16 %v184
    %v197 = vpack.c.b16 %v194, %v193
    %v198 = vpack.c.b16 %v196, %v195
    %v202 = vsel %vm155, %v180, 0
    %204 = vmatpush.bf16.msra.mxu0 0
    %205 = vmatpush.bf16.msra.mxu0 0
    %206 = vmatpush.bf16.msra.mxu0 0
    %207 = vmatpush.bf16.msra.mxu0 0
    %208 = vmatpush.bf16.msra.mxu0 0
    %209 = vmatpush.bf16.msra.mxu0 0
    %210 = vmatpush.bf16.msra.mxu0 %v198
    %211 = vmatpush.bf16.msra.mxu0 %v197
    %212 = vmatmul.bf16.gmra.mxu0 %v202
    %v213 = vpop.f32.mrf.mxu0
    %v214 = vadd.f32 %v187, %v213
    %v215 = vpop.f32.mrf.mxu0
    %v216 = vadd.f32 %v187, %v215
    %217 = vdwg.mxu0
    %v218 = vpack.c.bf16 %v214, %v214
    %v219 = vpack.c.bf16 %v216, %v216
    %220 = vst.msk [vmem:[#allocation14] sm:$0xf] %vm175, %v218
    %221 = vst.msk [vmem:[#allocation14 + $0x4] sm:$0xf] %vm175, %v219
    %v222 = vld [vmem:[#allocation7] sm:$0xff]
    %v223 = vld [vmem:[#allocation7 + $0x8] sm:$0xff]
    %v224 = vpack.c.bf16 %v223, %v222
    %v225 = vld [vmem:[#allocation11] sm:$0xf]
    %v226 = vld [vmem:[#allocation11 + $0x4] sm:$0xf]
    %v227 = vld [vmem:[#allocation11 + $0x8] sm:$0xf]
    %v228 = vld [vmem:[#allocation11 + $0xc] sm:$0xf]
    %v229 = vld [vmem:[%s8] sm:$0x1]
    %v231 = vperm.slane %v229, 0
    %v237 = vunpack.c.l.b16 %v225
    %v238 = vunpack.c.l.b16 %v226
    %v239 = vunpack.c.l.b16 %v227
    %v240 = vunpack.c.l.b16 %v228
    %v241 = vpack.c.b16 %v238, %v237
    %v242 = vpack.c.b16 %v240, %v239
    %v246 = vsel %vm155, %v224, 0
    %248 = vmatpush.bf16.msra.mxu0 0
    %249 = vmatpush.bf16.msra.mxu0 0
    %250 = vmatpush.bf16.msra.mxu0 0
    %251 = vmatpush.bf16.msra.mxu0 0
    %252 = vmatpush.bf16.msra.mxu0 0
    %253 = vmatpush.bf16.msra.mxu0 0
    %254 = vmatpush.bf16.msra.mxu0 %v242
    %255 = vmatpush.bf16.msra.mxu0 %v241
    %256 = vmatmul.bf16.gmra.mxu0 %v246
    %v257 = vpop.f32.mrf.mxu0
    %v258 = vadd.f32 %v231, %v257
    %v259 = vpop.f32.mrf.mxu0
    %v260 = vadd.f32 %v231, %v259
    %261 = vdwg.mxu0
    %v262 = vpack.c.bf16 %v258, %v258
    %v263 = vpack.c.bf16 %v260, %v260
    %264 = vst.msk [vmem:[#allocation16] sm:$0xf] %vm175, %v262
    %265 = vst.msk [vmem:[#allocation16 + $0x4] sm:$0xf] %vm175, %v263
    // Predicated region
    $region62: #{tpu_custom_call.1} parent=1 // pred_check
      _
    $region63: #{tpu_custom_call.1} parent=1 // pred_check_branch
      %267 = sbr.rel (0) target = $region65
    $region64: #{tpu_custom_call.1} parent=1 // pred_region
      %269 = vsyncadd [#allocation4], 0
      %s270 = sshll.u32 [#allocation13], 4
      %s271 = int_to_ptr.vmem [resolvable:$true] %s270
      %s272 = sshll.u32 %s9, 4
      %s273 = int_to_ptr.hbm [resolvable:$true] %s272
      %278 = dma.vmem_to_hbm [thread:$0]  %s271, 128, %s273, [#allocation4], 64, 64, 4
    $region65: #{tpu_custom_call.1} parent=1 // pred_fallthru
      _
    // Predicated region
    $region66: #{tpu_custom_call.1} parent=1 // pred_check
      _
    $region67: #{tpu_custom_call.1} parent=1 // pred_check_branch
      %280 = sbr.rel (0) target = $region69
    $region68: #{tpu_custom_call.1} parent=1 // pred_region
      %282 = vsyncadd [#allocation15], 0
      %s283 = sshll.u32 [#allocation14], 4
      %s284 = int_to_ptr.vmem [resolvable:$true] %s283
      %s285 = sshll.u32 %s10, 4
      %s286 = int_to_ptr.hbm [resolvable:$true] %s285
      %291 = dma.vmem_to_hbm [thread:$0]  %s284, 128, %s286, [#allocation15], 64, 64, 4
    $region69: #{tpu_custom_call.1} parent=1 // pred_fallthru
      _
    // Predicated region
    $region70: #{tpu_custom_call.1} parent=1 // pred_check
      _
    $region71: #{tpu_custom_call.1} parent=1 // pred_check_branch
      %293 = sbr.rel (0) target = $region73
    $region72: #{tpu_custom_call.1} parent=1 // pred_region
      %295 = vsyncadd [#allocation15], 0
      %s296 = sshll.u32 [#allocation16], 4
      %s297 = int_to_ptr.vmem [resolvable:$true] %s296
      %s298 = sshll.u32 %s11, 4
      %s299 = int_to_ptr.hbm [resolvable:$true] %s298
      %304 = dma.vmem_to_hbm [thread:$0]  %s297, 128, %s299, [#allocation15], 64, 64, 4
    $region73: #{tpu_custom_call.1} parent=1 // pred_fallthru
      _
    // Predicated region
    $region74: #{tpu_custom_call.1} parent=1 // pred_check
      _
    $region75: #{tpu_custom_call.1} parent=1 // pred_check_branch
      %306 = sbr.rel (0) target = $region77
    $region76: #{tpu_custom_call.1} parent=1 // pred_region
      %308 = dma.done [#allocation4], 128
    $region77: #{tpu_custom_call.1} parent=1 // pred_fallthru
      _
    // Predicated region
    $region78: #{tpu_custom_call.1} parent=1 // pred_check
      _
    $region79: #{tpu_custom_call.1} parent=1 // pred_check_branch
      %310 = sbr.rel (0) target = $region81
    $region80: #{tpu_custom_call.1} parent=1 // pred_region
      %312 = dma.done [#allocation15], 128
    $region81: #{tpu_custom_call.1} parent=1 // pred_fallthru
      _
    // Predicated region
    $region82: #{tpu_custom_call.1} parent=1 // pred_check
      _
    $region83: #{tpu_custom_call.1} parent=1 // pred_check_branch
      %314 = sbr.rel (0) target = $region85
    $region84: #{tpu_custom_call.1} parent=1 // pred_region
      %316 = dma.done [#allocation15], 128
    $region85: #{tpu_custom_call.1} parent=1 // pred_fallthru
      _
    %317 = vsyncpa [#allocation3], 1
    %318 = vsyncpa [#allocation6], 1
    %319 = vsyncpa [#allocation9], 1
    %320 = vsyncpa [#allocation12], 1
    %321 = vsyncpa [#allocation4], 1
    %322 = vsyncpa [#allocation15], 1

</llo_original>
